<compile_context>
chip_gen: v7x
topology: tpu7x:2x2x1
jax: 0.10.0
libtpu: 0.0.40
codegen_flags: <defaults>
</compile_context>

<pallas_src>
import jax
import jax.numpy as jnp
from jax.experimental import pallas as pl
from jax.experimental.pallas import tpu as pltpu


def _make_kernels(TH, W):
    """Builds the (halo-strip, whole-image) kernel bodies for a TH-row strip."""
    f32 = jnp.float32

    def _compute(o_ref, midv, top, bot, w, b):
        # midv: (TH, W, C) f32 strip
        # top/bot: (1, W, C) f32 halo rows, or None (None == the conv's zero padding)
        # w: (9, 1, C) taps, row k = kh*3 + kw;  b: (1, C) bias
        C = midv.shape[-1]

        def col_partial(kw):
            # Sum over the 3 row taps for column offset `kw`, with NO column
            # shift yet: output row r gets  mid[r]*w[1,kw] + row_above*w[0,kw]
            # + row_below*w[2,kw].  Built from leading-dim slices (no
            # rows_up / rows_dn strip copies).
            w_up, w_ct, w_dn = w[kw], w[3 + kw], w[6 + kw]          # (1, C) each
            first = midv[0:1] * w_ct
            if top is not None:
                first = first + top * w_up
            if TH > 1:
                first = first + midv[1:2] * w_dn
            elif bot is not None:
                first = first + bot * w_dn
            if TH == 1:
                return first
            last = midv[TH - 1:TH] * w_ct + midv[TH - 2:TH - 1] * w_up
            if bot is not None:
                last = last + bot * w_dn
            if TH == 2:
                return jnp.concatenate([first, last], axis=0)
            inner = (midv[1:TH - 1] * w_ct
                     + midv[0:TH - 2] * w_up
                     + midv[2:TH] * w_dn)
            return jnp.concatenate([first, inner, last], axis=0)

        s0 = col_partial(0)   # reads input col j-1 -> shift right by one column
        s1 = col_partial(1)   # centered, no shift
        s2 = col_partial(2)   # reads input col j+1 -> shift left by one column

        acc = s1 + b
        if W > 1:
            col = jax.lax.broadcasted_iota(jnp.int32, (W, C), 0)
            # kw = 0: output col j reads input col j-1; col 0 is zero padding.
            left = jnp.where(col == 0, 0.0, pltpu.roll(s0, shift=1, axis=1))
            # kw = 2: output col j reads input col j+1; col W-1 is zero padding.
            # shift = W-1 is -1 mod W (pltpu.roll takes a non-negative shift).
            # TODO(synk): confirm via pl.lower_as_mlir that the W-1 rotate stays
            # a single sublane rotate on all generations.
            right = jnp.where(col == W - 1, 0.0,
                              pltpu.roll(s2, shift=W - 1, axis=1))
            acc = acc + left + right
        o_ref[0] = acc.astype(o_ref.dtype)

    def kernel_halo(x_top_ref, x_mid_ref, x_bot_ref, w_ref, b_ref, o_ref):
        h = pl.program_id(1)
        nh = pl.num_programs(1)
        w = w_ref[...].astype(f32)
        b = b_ref[...].astype(f32)
        midv = x_mid_ref[0].astype(f32)
        top = x_top_ref[0].astype(f32)
        bot = x_bot_ref[0].astype(f32)
        # The halo index maps clamp at the image borders, so the clamped rows
        # must act as the conv's zero padding there.  Select (don't multiply
        # by 0) so Inf/NaN in the clamped row cannot become NaN.
        h_b = jnp.full(top.shape, h, dtype=jnp.int32)
        top = jnp.where(h_b > 0, top, 0.0)
        bot = jnp.where(h_b < nh - 1, bot, 0.0)
        _compute(o_ref, midv, top, bot, w, b)

    def kernel_whole(x_ref, w_ref, b_ref, o_ref):
        # Whole image per step: zero padding falls out of simply omitting the
        # missing neighbour rows at the strip borders (top=bot=None).
        w = w_ref[...].astype(f32)
        b = b_ref[...].astype(f32)
        _compute(o_ref, x_ref[0].astype(f32), None, None, w, b)

    return kernel_halo, kernel_whole


def _vmem_capacity_bytes():
    """Generation-aware VMEM capacity; falls back to the v7x (smallest) figure."""
    try:
        return int(getattr(pltpu.get_tpu_info(), "vmem_capacity_bytes", 64 << 20))
    except Exception:
        return 64 << 20


def _strip_footprint_per_row(W, Cp, io_itemsize):
    # Per strip row: 2x double-buffered input block + 2x output block at the
    # I/O dtype, plus ~6 strip-sized f32 intermediates the kernel materializes
    # (f32 strip, three column partials, two rolled/selected taps).
    row_io = W * Cp * io_itemsize
    row_f32 = W * Cp * 4
    return 4 * row_io + 6 * row_f32


def _choose_tiling(B, H, W, Cp, io_itemsize, budget_bytes):
    """Returns (TH, nh) with nh * TH >= H (H is padded up to nh*TH if needed)."""
    per_row = _strip_footprint_per_row(W, Cp, io_itemsize)
    max_th = max(1, min(H, budget_bytes // per_row))
    if B < 2 and H >= 2:
        # Keep at least two grid steps so both v7x TensorCores get work.
        max_th = min(max_th, -(-H // 2))
    if max_th >= H:
        return H, 1
    # Prefer a divisor of H (no ragged last strip, no padding).
    best_div = 1
    for th in range(max_th, 0, -1):
        if H % th == 0:
            best_div = th
            break
    if 2 * best_div >= max_th:
        return best_div, H // best_div
    # Awkward H (no VMEM-friendly divisor): near-max strips, pad H to nh*TH.
    nh = -(-H // max_th)
    th = -(-H // nh)
    return th, nh


def dwconv3x3(x_nchw, weight, bias, *, tile_h=None):
    """Depthwise 3x3 conv, stride 1, padding 1, groups=C, with bias.

    x_nchw: (B, C, H, W);  weight: (3, 3, C);  bias: (C,).
    Returns (B, C, H, W) in the input dtype (bf16 passes straight through;
    accumulation is f32 inside the kernel).
    """
    B, C, H, W = x_nchw.shape
    assert weight.shape == (3, 3, C)
    assert bias.shape == (C,)

    # Pad channels to a multiple of 128 so the lane dim stays dense
    # (no-op at production C=768; needed for tiny test sizes like C=4).
    Cp = ((C + 127) // 128) * 128

    # TODO(synk): keep the whole model NHWC so this transpose pair (and the one
    # on the way out) disappears; it is pure layout plumbing around the kernel.
    x = jnp.transpose(x_nchw, (0, 2, 3, 1))          # (B, H, W, C)
    w = weight.reshape(9, 1, C)                      # row k = kh*3 + kw
    b = bias.reshape(1, C)
    if Cp != C:
        x = jnp.pad(x, ((0, 0), (0, 0), (0, 0), (0, Cp - C)))
        w = jnp.pad(w, ((0, 0), (0, 0), (0, Cp - C)))
        b = jnp.pad(b, ((0, 0), (0, Cp - C)))

    io_itemsize = jnp.dtype(x.dtype).itemsize
    vmem_cap = _vmem_capacity_bytes()
    vmem_limit = max(min(vmem_cap * 3 // 4, 100 << 20), 32 << 20)
    budget = vmem_limit // 2                          # headroom for the compiler

    if tile_h is None:
        TH, nh = _choose_tiling(B, H, W, Cp, io_itemsize, budget)
    else:
        assert H % tile_h == 0, "tile_h must divide H"
        TH, nh = tile_h, H // tile_h

    Hp = TH * nh
    if Hp != H:
        # Rare fallback (awkward H): zero rows below the image reproduce the
        # conv's bottom zero padding; the extra output rows are sliced off.
        x = jnp.pad(x, ((0, 0), (0, Hp - H), (0, 0), (0, 0)))

    kernel_halo, kernel_whole = _make_kernels(TH, W)

    w_spec = pl.BlockSpec((9, 1, Cp), lambda *idx: (0, 0, 0))
    b_spec = pl.BlockSpec((1, Cp), lambda *idx: (0, 0))

    if nh == 1:
        grid = (B,)
        in_specs = [
            pl.BlockSpec((1, Hp, W, Cp), lambda bb: (bb, 0, 0, 0)),
            w_spec, b_spec,
        ]
        out_specs = pl.BlockSpec((1, Hp, W, Cp), lambda bb: (bb, 0, 0, 0))
        operands = (x, w, b)
        kernel = kernel_whole
        dim_sem = ("parallel",)
    else:
        grid = (B, nh)
        in_specs = [
            # Halo row above the strip (H-block size 1 -> block index == row index).
            pl.BlockSpec((1, 1, W, Cp),
                         lambda bb, hh: (bb, jnp.maximum(hh * TH - 1, 0), 0, 0)),
            # The strip itself.
            pl.BlockSpec((1, TH, W, Cp), lambda bb, hh: (bb, hh, 0, 0)),
            # Halo row below the strip (clamped at the bottom; masked in-kernel).
            pl.BlockSpec((1, 1, W, Cp),
                         lambda bb, hh: (bb, jnp.minimum((hh + 1) * TH, Hp - 1), 0, 0)),
            w_spec, b_spec,
        ]
        out_specs = pl.BlockSpec((1, TH, W, Cp), lambda bb, hh: (bb, hh, 0, 0))
        operands = (x, x, x, w, b)
        kernel = kernel_halo
        dim_sem = ("parallel", "parallel")

    in_bytes = x.size * io_itemsize
    if nh > 1:
        in_bytes += 2 * B * nh * W * Cp * io_itemsize   # halo row re-reads
    out_bytes = B * Hp * W * Cp * io_itemsize
    cost = pl.CostEstimate(
        flops=int(18 * B * Hp * W * Cp),
        transcendentals=0,
        bytes_accessed=int(in_bytes + out_bytes
                           + w.size * jnp.dtype(w.dtype).itemsize
                           + b.size * jnp.dtype(b.dtype).itemsize),
    )

    out_nhwc = pl.pallas_call(
        kernel,
        out_shape=jax.ShapeDtypeStruct((B, Hp, W, Cp), x_nchw.dtype),
        grid=grid,
        in_specs=in_specs,
        out_specs=out_specs,
        compiler_params=pltpu.CompilerParams(
            dimension_semantics=dim_sem,
            vmem_limit_bytes=int(vmem_limit)),
        cost_estimate=cost,
    )(*operands)

    if Hp != H or Cp != C:
        out_nhwc = out_nhwc[:, :H, :, :C]
    return jnp.transpose(out_nhwc, (0, 3, 1, 2))      # back to NCHW


def reference_dwconv3x3(x_nchw, weight, bias):
    """Pure-JAX reference using lax.conv_general_dilated (depthwise)."""
    C = x_nchw.shape[1]
    k = weight.reshape(3, 3, 1, C)
    y = jax.lax.conv_general_dilated(
        x_nchw.astype(jnp.float32), k.astype(jnp.float32),
        window_strides=(1, 1), padding=((1, 1), (1, 1)),
        dimension_numbers=("NCHW", "HWIO", "NCHW"),
        feature_group_count=C)
    return y + bias.reshape(1, C, 1, 1)


if __name__ == "__main__":
    key = jax.random.PRNGKey(0)
    B, C, H, W = 2, 4, 16, 16   # small shapes; the module default dim=768 is just C

    kx, kw, kb = jax.random.split(key, 3)
    x = jax.random.normal(kx, (B, C, H, W), dtype=jnp.float32)
    weight = jax.random.normal(kw, (3, 3, C), dtype=jnp.float32) * 0.1
    bias = jax.random.normal(kb, (C,), dtype=jnp.float32) * 0.1

    ref = reference_dwconv3x3(x, weight, bias)

    # Multi-strip halo path (exercises top/bottom border masking).
    out = jax.block_until_ready(dwconv3x3(x, weight, bias, tile_h=8))
    assert out.shape == (B, C, H, W)
    assert jnp.allclose(out, ref, atol=1e-5, rtol=1e-5), "mismatch vs reference (tile_h=8)"

    # Auto tiling: whole-image strips, halos dropped (B >= 2 keeps both v7x cores busy).
    out2 = jax.block_until_ready(dwconv3x3(x, weight, bias))
    assert jnp.allclose(out2, ref, atol=1e-5, rtol=1e-5), "mismatch vs reference (auto tile)"

    # B == 1 auto path: chooser forces >= 2 strips so a v7x chip uses both TensorCores.
    ref1 = reference_dwconv3x3(x[:1], weight, bias)
    out3 = jax.block_until_ready(dwconv3x3(x[:1], weight, bias))
    assert jnp.allclose(out3, ref1, atol=1e-5, rtol=1e-5), "mismatch vs reference (B=1 auto)"

    print("KERNEL_OK")
</pallas_src>

<mosaic_0001>
module attributes {stable_mosaic.version = 11 : i64} {
  func.func @kernel_halo(%arg0: i32, %arg1: i32, %arg2: memref<1x1x16x128xf32, #tpu.memory_space<vmem>>, %arg3: memref<1x8x16x128xf32, #tpu.memory_space<vmem>>, %arg4: memref<1x1x16x128xf32, #tpu.memory_space<vmem>>, %arg5: memref<9x1x128xf32, #tpu.memory_space<vmem>>, %arg6: memref<1x128xf32, #tpu.memory_space<vmem>>, %arg7: memref<1x8x16x128xf32, #tpu.memory_space<vmem>>) attributes {dimension_semantics = [#tpu.dimension_semantics<parallel>, #tpu.dimension_semantics<parallel>], iteration_bounds = array<i64: 2, 2>, scalar_prefetch = 0 : i64, scratch_operands = 0 : i64, tpu.core_type = #tpu.core_type<tc>, window_params = [{transform_indices = @transform_0, window_bounds = array<i64: 1, 1, 16, 128>}, {transform_indices = @transform_1, window_bounds = array<i64: 1, 8, 16, 128>}, {transform_indices = @transform_2, window_bounds = array<i64: 1, 1, 16, 128>}, {pipeline_mode = #tpu.pipeline_mode<synchronous>, transform_indices = @transform_3, window_bounds = array<i64: 9, 1, 128>}, {pipeline_mode = #tpu.pipeline_mode<synchronous>, transform_indices = @transform_4, window_bounds = array<i64: 1, 128>}, {transform_indices = @transform_5, window_bounds = array<i64: 1, 8, 16, 128>}]} {
    %c0 = arith.constant 0 : index
    %c0_0 = arith.constant 0 : index
    %c0_1 = arith.constant 0 : index
    %0 = vector.load %arg5[%c0, %c0_0, %c0_1] : memref<9x1x128xf32, #tpu.memory_space<vmem>>, vector<9x1x128xf32>
    %c0_2 = arith.constant 0 : index
    %c0_3 = arith.constant 0 : index
    %1 = vector.load %arg6[%c0_2, %c0_3] : memref<1x128xf32, #tpu.memory_space<vmem>>, vector<1x128xf32>
    %c0_4 = arith.constant 0 : index
    %c0_5 = arith.constant 0 : index
    %c0_6 = arith.constant 0 : index
    %c0_7 = arith.constant 0 : index
    %2 = vector.load %arg3[%c0_4, %c0_5, %c0_6, %c0_7] : memref<1x8x16x128xf32, #tpu.memory_space<vmem>>, vector<1x8x16x128xf32>
    %3 = vector.shape_cast %2 : vector<1x8x16x128xf32> to vector<8x16x128xf32>
    %c0_8 = arith.constant 0 : index
    %c0_9 = arith.constant 0 : index
    %c0_10 = arith.constant 0 : index
    %c0_11 = arith.constant 0 : index
    %4 = vector.load %arg2[%c0_8, %c0_9, %c0_10, %c0_11] : memref<1x1x16x128xf32, #tpu.memory_space<vmem>>, vector<1x1x16x128xf32>
    %5 = vector.shape_cast %4 : vector<1x1x16x128xf32> to vector<1x16x128xf32>
    %c0_12 = arith.constant 0 : index
    %c0_13 = arith.constant 0 : index
    %c0_14 = arith.constant 0 : index
    %c0_15 = arith.constant 0 : index
    %6 = vector.load %arg4[%c0_12, %c0_13, %c0_14, %c0_15] : memref<1x1x16x128xf32, #tpu.memory_space<vmem>>, vector<1x1x16x128xf32>
    %7 = vector.shape_cast %6 : vector<1x1x16x128xf32> to vector<1x16x128xf32>
    %8 = vector.broadcast %arg1 : i32 to vector<1x16x128xi32>
    %c0_i32 = arith.constant 0 : i32
    %9 = vector.broadcast %c0_i32 : i32 to vector<1x16x128xi32>
    %10 = arith.cmpi sgt, %8, %9 : vector<1x16x128xi32>
    %cst = arith.constant 0.000000e+00 : f32
    %11 = vector.broadcast %cst : f32 to vector<1x16x128xf32>
    %12 = arith.select %10, %5, %11 : vector<1x16x128xi1>, vector<1x16x128xf32>
    %c1_i32 = arith.constant 1 : i32
    %13 = vector.broadcast %c1_i32 : i32 to vector<1x16x128xi32>
    %14 = arith.cmpi slt, %8, %13 : vector<1x16x128xi32>
    %cst_16 = arith.constant 0.000000e+00 : f32
    %15 = vector.broadcast %cst_16 : f32 to vector<1x16x128xf32>
    %16 = arith.select %14, %7, %15 : vector<1x16x128xi1>, vector<1x16x128xf32>
    %17 = vector.extract_strided_slice %0 {offsets = [0, 0, 0], sizes = [1, 1, 128], strides = [1, 1, 1]} : vector<9x1x128xf32> to vector<1x1x128xf32>
    %18 = vector.shape_cast %17 : vector<1x1x128xf32> to vector<1x128xf32>
    %19 = vector.extract_strided_slice %0 {offsets = [3, 0, 0], sizes = [1, 1, 128], strides = [1, 1, 1]} : vector<9x1x128xf32> to vector<1x1x128xf32>
    %20 = vector.shape_cast %19 : vector<1x1x128xf32> to vector<1x128xf32>
    %21 = vector.extract_strided_slice %0 {offsets = [6, 0, 0], sizes = [1, 1, 128], strides = [1, 1, 1]} : vector<9x1x128xf32> to vector<1x1x128xf32>
    %22 = vector.shape_cast %21 : vector<1x1x128xf32> to vector<1x128xf32>
    %23 = vector.extract_strided_slice %3 {offsets = [0, 0, 0], sizes = [1, 16, 128], strides = [1, 1, 1]} : vector<8x16x128xf32> to vector<1x16x128xf32>
    %24 = vector.shape_cast %20 : vector<1x128xf32> to vector<1x1x128xf32>
    %25 = vector.broadcast %24 : vector<1x1x128xf32> to vector<1x16x128xf32>
    %26 = arith.mulf %23, %25 : vector<1x16x128xf32>
    %27 = vector.shape_cast %18 : vector<1x128xf32> to vector<1x1x128xf32>
    %28 = vector.broadcast %27 : vector<1x1x128xf32> to vector<1x16x128xf32>
    %29 = arith.mulf %12, %28 : vector<1x16x128xf32>
    %30 = arith.addf %26, %29 : vector<1x16x128xf32>
    %31 = vector.extract_strided_slice %3 {offsets = [1, 0, 0], sizes = [1, 16, 128], strides = [1, 1, 1]} : vector<8x16x128xf32> to vector<1x16x128xf32>
    %32 = vector.shape_cast %22 : vector<1x128xf32> to vector<1x1x128xf32>
    %33 = vector.broadcast %32 : vector<1x1x128xf32> to vector<1x16x128xf32>
    %34 = arith.mulf %31, %33 : vector<1x16x128xf32>
    %35 = arith.addf %30, %34 : vector<1x16x128xf32>
    %36 = vector.extract_strided_slice %3 {offsets = [7, 0, 0], sizes = [1, 16, 128], strides = [1, 1, 1]} : vector<8x16x128xf32> to vector<1x16x128xf32>
    %37 = vector.shape_cast %20 : vector<1x128xf32> to vector<1x1x128xf32>
    %38 = vector.broadcast %37 : vector<1x1x128xf32> to vector<1x16x128xf32>
    %39 = arith.mulf %36, %38 : vector<1x16x128xf32>
    %40 = vector.extract_strided_slice %3 {offsets = [6, 0, 0], sizes = [1, 16, 128], strides = [1, 1, 1]} : vector<8x16x128xf32> to vector<1x16x128xf32>
    %41 = vector.shape_cast %18 : vector<1x128xf32> to vector<1x1x128xf32>
    %42 = vector.broadcast %41 : vector<1x1x128xf32> to vector<1x16x128xf32>
    %43 = arith.mulf %40, %42 : vector<1x16x128xf32>
    %44 = arith.addf %39, %43 : vector<1x16x128xf32>
    %45 = vector.shape_cast %22 : vector<1x128xf32> to vector<1x1x128xf32>
    %46 = vector.broadcast %45 : vector<1x1x128xf32> to vector<1x16x128xf32>
    %47 = arith.mulf %16, %46 : vector<1x16x128xf32>
    %48 = arith.addf %44, %47 : vector<1x16x128xf32>
    %49 = vector.extract_strided_slice %3 {offsets = [1, 0, 0], sizes = [6, 16, 128], strides = [1, 1, 1]} : vector<8x16x128xf32> to vector<6x16x128xf32>
    %50 = vector.shape_cast %20 : vector<1x128xf32> to vector<1x1x128xf32>
    %51 = vector.broadcast %50 : vector<1x1x128xf32> to vector<6x16x128xf32>
    %52 = arith.mulf %49, %51 : vector<6x16x128xf32>
    %53 = vector.extract_strided_slice %3 {offsets = [0, 0, 0], sizes = [6, 16, 128], strides = [1, 1, 1]} : vector<8x16x128xf32> to vector<6x16x128xf32>
    %54 = vector.shape_cast %18 : vector<1x128xf32> to vector<1x1x128xf32>
    %55 = vector.broadcast %54 : vector<1x1x128xf32> to vector<6x16x128xf32>
    %56 = arith.mulf %53, %55 : vector<6x16x128xf32>
    %57 = arith.addf %52, %56 : vector<6x16x128xf32>
    %58 = vector.extract_strided_slice %3 {offsets = [2, 0, 0], sizes = [6, 16, 128], strides = [1, 1, 1]} : vector<8x16x128xf32> to vector<6x16x128xf32>
    %59 = vector.shape_cast %22 : vector<1x128xf32> to vector<1x1x128xf32>
    %60 = vector.broadcast %59 : vector<1x1x128xf32> to vector<6x16x128xf32>
    %61 = arith.mulf %58, %60 : vector<6x16x128xf32>
    %62 = arith.addf %57, %61 : vector<6x16x128xf32>
    %63 = tpu.concatenate %35, %62, %48 in 0 : vector<1x16x128xf32>, vector<6x16x128xf32>, vector<1x16x128xf32> -> vector<8x16x128xf32>
    %64 = vector.extract_strided_slice %0 {offsets = [1, 0, 0], sizes = [1, 1, 128], strides = [1, 1, 1]} : vector<9x1x128xf32> to vector<1x1x128xf32>
    %65 = vector.shape_cast %64 : vector<1x1x128xf32> to vector<1x128xf32>
    %66 = vector.extract_strided_slice %0 {offsets = [4, 0, 0], sizes = [1, 1, 128], strides = [1, 1, 1]} : vector<9x1x128xf32> to vector<1x1x128xf32>
    %67 = vector.shape_cast %66 : vector<1x1x128xf32> to vector<1x128xf32>
    %68 = vector.extract_strided_slice %0 {offsets = [7, 0, 0], sizes = [1, 1, 128], strides = [1, 1, 1]} : vector<9x1x128xf32> to vector<1x1x128xf32>
    %69 = vector.shape_cast %68 : vector<1x1x128xf32> to vector<1x128xf32>
    %70 = vector.extract_strided_slice %3 {offsets = [0, 0, 0], sizes = [1, 16, 128], strides = [1, 1, 1]} : vector<8x16x128xf32> to vector<1x16x128xf32>
    %71 = vector.shape_cast %67 : vector<1x128xf32> to vector<1x1x128xf32>
    %72 = vector.broadcast %71 : vector<1x1x128xf32> to vector<1x16x128xf32>
    %73 = arith.mulf %70, %72 : vector<1x16x128xf32>
    %74 = vector.shape_cast %65 : vector<1x128xf32> to vector<1x1x128xf32>
    %75 = vector.broadcast %74 : vector<1x1x128xf32> to vector<1x16x128xf32>
    %76 = arith.mulf %12, %75 : vector<1x16x128xf32>
    %77 = arith.addf %73, %76 : vector<1x16x128xf32>
    %78 = vector.extract_strided_slice %3 {offsets = [1, 0, 0], sizes = [1, 16, 128], strides = [1, 1, 1]} : vector<8x16x128xf32> to vector<1x16x128xf32>
    %79 = vector.shape_cast %69 : vector<1x128xf32> to vector<1x1x128xf32>
    %80 = vector.broadcast %79 : vector<1x1x128xf32> to vector<1x16x128xf32>
    %81 = arith.mulf %78, %80 : vector<1x16x128xf32>
    %82 = arith.addf %77, %81 : vector<1x16x128xf32>
    %83 = vector.extract_strided_slice %3 {offsets = [7, 0, 0], sizes = [1, 16, 128], strides = [1, 1, 1]} : vector<8x16x128xf32> to vector<1x16x128xf32>
    %84 = vector.shape_cast %67 : vector<1x128xf32> to vector<1x1x128xf32>
    %85 = vector.broadcast %84 : vector<1x1x128xf32> to vector<1x16x128xf32>
    %86 = arith.mulf %83, %85 : vector<1x16x128xf32>
    %87 = vector.extract_strided_slice %3 {offsets = [6, 0, 0], sizes = [1, 16, 128], strides = [1, 1, 1]} : vector<8x16x128xf32> to vector<1x16x128xf32>
    %88 = vector.shape_cast %65 : vector<1x128xf32> to vector<1x1x128xf32>
    %89 = vector.broadcast %88 : vector<1x1x128xf32> to vector<1x16x128xf32>
    %90 = arith.mulf %87, %89 : vector<1x16x128xf32>
    %91 = arith.addf %86, %90 : vector<1x16x128xf32>
    %92 = vector.shape_cast %69 : vector<1x128xf32> to vector<1x1x128xf32>
    %93 = vector.broadcast %92 : vector<1x1x128xf32> to vector<1x16x128xf32>
    %94 = arith.mulf %16, %93 : vector<1x16x128xf32>
    %95 = arith.addf %91, %94 : vector<1x16x128xf32>
    %96 = vector.extract_strided_slice %3 {offsets = [1, 0, 0], sizes = [6, 16, 128], strides = [1, 1, 1]} : vector<8x16x128xf32> to vector<6x16x128xf32>
    %97 = vector.shape_cast %67 : vector<1x128xf32> to vector<1x1x128xf32>
    %98 = vector.broadcast %97 : vector<1x1x128xf32> to vector<6x16x128xf32>
    %99 = arith.mulf %96, %98 : vector<6x16x128xf32>
    %100 = vector.extract_strided_slice %3 {offsets = [0, 0, 0], sizes = [6, 16, 128], strides = [1, 1, 1]} : vector<8x16x128xf32> to vector<6x16x128xf32>
    %101 = vector.shape_cast %65 : vector<1x128xf32> to vector<1x1x128xf32>
    %102 = vector.broadcast %101 : vector<1x1x128xf32> to vector<6x16x128xf32>
    %103 = arith.mulf %100, %102 : vector<6x16x128xf32>
    %104 = arith.addf %99, %103 : vector<6x16x128xf32>
    %105 = vector.extract_strided_slice %3 {offsets = [2, 0, 0], sizes = [6, 16, 128], strides = [1, 1, 1]} : vector<8x16x128xf32> to vector<6x16x128xf32>
    %106 = vector.shape_cast %69 : vector<1x128xf32> to vector<1x1x128xf32>
    %107 = vector.broadcast %106 : vector<1x1x128xf32> to vector<6x16x128xf32>
    %108 = arith.mulf %105, %107 : vector<6x16x128xf32>
    %109 = arith.addf %104, %108 : vector<6x16x128xf32>
    %110 = tpu.concatenate %82, %109, %95 in 0 : vector<1x16x128xf32>, vector<6x16x128xf32>, vector<1x16x128xf32> -> vector<8x16x128xf32>
    %111 = vector.extract_strided_slice %0 {offsets = [2, 0, 0], sizes = [1, 1, 128], strides = [1, 1, 1]} : vector<9x1x128xf32> to vector<1x1x128xf32>
    %112 = vector.shape_cast %111 : vector<1x1x128xf32> to vector<1x128xf32>
    %113 = vector.extract_strided_slice %0 {offsets = [5, 0, 0], sizes = [1, 1, 128], strides = [1, 1, 1]} : vector<9x1x128xf32> to vector<1x1x128xf32>
    %114 = vector.shape_cast %113 : vector<1x1x128xf32> to vector<1x128xf32>
    %115 = vector.extract_strided_slice %0 {offsets = [8, 0, 0], sizes = [1, 1, 128], strides = [1, 1, 1]} : vector<9x1x128xf32> to vector<1x1x128xf32>
    %116 = vector.shape_cast %115 : vector<1x1x128xf32> to vector<1x128xf32>
    %117 = vector.extract_strided_slice %3 {offsets = [0, 0, 0], sizes = [1, 16, 128], strides = [1, 1, 1]} : vector<8x16x128xf32> to vector<1x16x128xf32>
    %118 = vector.shape_cast %114 : vector<1x128xf32> to vector<1x1x128xf32>
    %119 = vector.broadcast %118 : vector<1x1x128xf32> to vector<1x16x128xf32>
    %120 = arith.mulf %117, %119 : vector<1x16x128xf32>
    %121 = vector.shape_cast %112 : vector<1x128xf32> to vector<1x1x128xf32>
    %122 = vector.broadcast %121 : vector<1x1x128xf32> to vector<1x16x128xf32>
    %123 = arith.mulf %12, %122 : vector<1x16x128xf32>
    %124 = arith.addf %120, %123 : vector<1x16x128xf32>
    %125 = vector.extract_strided_slice %3 {offsets = [1, 0, 0], sizes = [1, 16, 128], strides = [1, 1, 1]} : vector<8x16x128xf32> to vector<1x16x128xf32>
    %126 = vector.shape_cast %116 : vector<1x128xf32> to vector<1x1x128xf32>
    %127 = vector.broadcast %126 : vector<1x1x128xf32> to vector<1x16x128xf32>
    %128 = arith.mulf %125, %127 : vector<1x16x128xf32>
    %129 = arith.addf %124, %128 : vector<1x16x128xf32>
    %130 = vector.extract_strided_slice %3 {offsets = [7, 0, 0], sizes = [1, 16, 128], strides = [1, 1, 1]} : vector<8x16x128xf32> to vector<1x16x128xf32>
    %131 = vector.shape_cast %114 : vector<1x128xf32> to vector<1x1x128xf32>
    %132 = vector.broadcast %131 : vector<1x1x128xf32> to vector<1x16x128xf32>
    %133 = arith.mulf %130, %132 : vector<1x16x128xf32>
    %134 = vector.extract_strided_slice %3 {offsets = [6, 0, 0], sizes = [1, 16, 128], strides = [1, 1, 1]} : vector<8x16x128xf32> to vector<1x16x128xf32>
    %135 = vector.shape_cast %112 : vector<1x128xf32> to vector<1x1x128xf32>
    %136 = vector.broadcast %135 : vector<1x1x128xf32> to vector<1x16x128xf32>
    %137 = arith.mulf %134, %136 : vector<1x16x128xf32>
    %138 = arith.addf %133, %137 : vector<1x16x128xf32>
    %139 = vector.shape_cast %116 : vector<1x128xf32> to vector<1x1x128xf32>
    %140 = vector.broadcast %139 : vector<1x1x128xf32> to vector<1x16x128xf32>
    %141 = arith.mulf %16, %140 : vector<1x16x128xf32>
    %142 = arith.addf %138, %141 : vector<1x16x128xf32>
    %143 = vector.extract_strided_slice %3 {offsets = [1, 0, 0], sizes = [6, 16, 128], strides = [1, 1, 1]} : vector<8x16x128xf32> to vector<6x16x128xf32>
    %144 = vector.shape_cast %114 : vector<1x128xf32> to vector<1x1x128xf32>
    %145 = vector.broadcast %144 : vector<1x1x128xf32> to vector<6x16x128xf32>
    %146 = arith.mulf %143, %145 : vector<6x16x128xf32>
    %147 = vector.extract_strided_slice %3 {offsets = [0, 0, 0], sizes = [6, 16, 128], strides = [1, 1, 1]} : vector<8x16x128xf32> to vector<6x16x128xf32>
    %148 = vector.shape_cast %112 : vector<1x128xf32> to vector<1x1x128xf32>
    %149 = vector.broadcast %148 : vector<1x1x128xf32> to vector<6x16x128xf32>
    %150 = arith.mulf %147, %149 : vector<6x16x128xf32>
    %151 = arith.addf %146, %150 : vector<6x16x128xf32>
    %152 = vector.extract_strided_slice %3 {offsets = [2, 0, 0], sizes = [6, 16, 128], strides = [1, 1, 1]} : vector<8x16x128xf32> to vector<6x16x128xf32>
    %153 = vector.shape_cast %116 : vector<1x128xf32> to vector<1x1x128xf32>
    %154 = vector.broadcast %153 : vector<1x1x128xf32> to vector<6x16x128xf32>
    %155 = arith.mulf %152, %154 : vector<6x16x128xf32>
    %156 = arith.addf %151, %155 : vector<6x16x128xf32>
    %157 = tpu.concatenate %129, %156, %142 in 0 : vector<1x16x128xf32>, vector<6x16x128xf32>, vector<1x16x128xf32> -> vector<8x16x128xf32>
    %158 = vector.shape_cast %1 : vector<1x128xf32> to vector<1x1x128xf32>
    %159 = vector.broadcast %158 : vector<1x1x128xf32> to vector<8x16x128xf32>
    %160 = arith.addf %110, %159 : vector<8x16x128xf32>
    %161 = tpu.iota {dimensions = array<i32: 0>} : vector<16x128xi32>
    %c0_i32_17 = arith.constant 0 : i32
    %162 = vector.broadcast %c0_i32_17 : i32 to vector<16x128xi32>
    %163 = arith.cmpi eq, %161, %162 : vector<16x128xi32>
    %c1_i32_18 = arith.constant 1 : i32
    %164 = tpu.dynamic_rotate %63 by %c1_i32_18 dim 1 : vector<8x16x128xf32>, i32 -> vector<8x16x128xf32>
    %cst_19 = arith.constant 0.000000e+00 : f32
    %165 = vector.shape_cast %163 : vector<16x128xi1> to vector<1x16x128xi1>
    %166 = vector.broadcast %165 : vector<1x16x128xi1> to vector<8x16x128xi1>
    %167 = vector.broadcast %cst_19 : f32 to vector<8x16x128xf32>
    %168 = arith.select %166, %167, %164 : vector<8x16x128xi1>, vector<8x16x128xf32>
    %c15_i32 = arith.constant 15 : i32
    %169 = vector.broadcast %c15_i32 : i32 to vector<16x128xi32>
    %170 = arith.cmpi eq, %161, %169 : vector<16x128xi32>
    %c15_i32_20 = arith.constant 15 : i32
    %171 = tpu.dynamic_rotate %157 by %c15_i32_20 dim 1 : vector<8x16x128xf32>, i32 -> vector<8x16x128xf32>
    %cst_21 = arith.constant 0.000000e+00 : f32
    %172 = vector.shape_cast %170 : vector<16x128xi1> to vector<1x16x128xi1>
    %173 = vector.broadcast %172 : vector<1x16x128xi1> to vector<8x16x128xi1>
    %174 = vector.broadcast %cst_21 : f32 to vector<8x16x128xf32>
    %175 = arith.select %173, %174, %171 : vector<8x16x128xi1>, vector<8x16x128xf32>
    %176 = arith.addf %160, %168 : vector<8x16x128xf32>
    %177 = arith.addf %176, %175 : vector<8x16x128xf32>
    %c0_22 = arith.constant 0 : index
    %c0_23 = arith.constant 0 : index
    %c0_24 = arith.constant 0 : index
    %c0_25 = arith.constant 0 : index
    %178 = vector.load %arg7[%c0_22, %c0_23, %c0_24, %c0_25] : memref<1x8x16x128xf32, #tpu.memory_space<vmem>>, vector<1x8x16x128xf32>
    %179 = vector.shape_cast %178 : vector<1x8x16x128xf32> to vector<8x16x128xf32>
    %180 = vector.shape_cast %177 : vector<8x16x128xf32> to vector<1x8x16x128xf32>
    tpu.vector_store %arg7[%c0_22, %c0_23, %c0_24, %c0_25], %180 {strides = array<i32>} : memref<1x8x16x128xf32, #tpu.memory_space<vmem>>, vector<1x8x16x128xf32>,
    return
  }
  func.func @transform_0(%arg0: i32, %arg1: i32) -> (i32, i32, i32, i32) {
    %c8_i32 = arith.constant 8 : i32
    %0 = arith.muli %arg1, %c8_i32 : i32
    %c1_i32 = arith.constant 1 : i32
    %1 = arith.subi %0, %c1_i32 : i32
    %c0_i32 = arith.constant 0 : i32
    %2 = arith.maxsi %1, %c0_i32 : i32
    %c0_i32_0 = arith.constant 0 : i32
    %c0_i32_1 = arith.constant 0 : i32
    %c0_i32_2 = arith.constant 0 : i32
    return %arg0, %2, %c0_i32_0, %c0_i32_1 : i32, i32, i32, i32
  }
  func.func @transform_1(%arg0: i32, %arg1: i32) -> (i32, i32, i32, i32) {
    %c0_i32 = arith.constant 0 : i32
    %c0_i32_0 = arith.constant 0 : i32
    %c0_i32_1 = arith.constant 0 : i32
    return %arg0, %arg1, %c0_i32, %c0_i32_0 : i32, i32, i32, i32
  }
  func.func @transform_2(%arg0: i32, %arg1: i32) -> (i32, i32, i32, i32) {
    %c1_i32 = arith.constant 1 : i32
    %0 = arith.addi %arg1, %c1_i32 : i32
    %c8_i32 = arith.constant 8 : i32
    %1 = arith.muli %0, %c8_i32 : i32
    %c15_i32 = arith.constant 15 : i32
    %2 = arith.minsi %1, %c15_i32 : i32
    %c0_i32 = arith.constant 0 : i32
    %c0_i32_0 = arith.constant 0 : i32
    %c0_i32_1 = arith.constant 0 : i32
    return %arg0, %2, %c0_i32, %c0_i32_0 : i32, i32, i32, i32
  }
  func.func @transform_3(%arg0: i32, %arg1: i32) -> (i32, i32, i32) {
    %c0_i32 = arith.constant 0 : i32
    %c0_i32_0 = arith.constant 0 : i32
    %c0_i32_1 = arith.constant 0 : i32
    %c0_i32_2 = arith.constant 0 : i32
    return %c0_i32, %c0_i32_0, %c0_i32_1 : i32, i32, i32
  }
  func.func @transform_4(%arg0: i32, %arg1: i32) -> (i32, i32) {
    %c0_i32 = arith.constant 0 : i32
    %c0_i32_0 = arith.constant 0 : i32
    %c0_i32_1 = arith.constant 0 : i32
    return %c0_i32, %c0_i32_0 : i32, i32
  }
  func.func @transform_5(%arg0: i32, %arg1: i32) -> (i32, i32, i32, i32) {
    %c0_i32 = arith.constant 0 : i32
    %c0_i32_0 = arith.constant 0 : i32
    %c0_i32_1 = arith.constant 0 : i32
    return %arg0, %arg1, %c0_i32, %c0_i32_0 : i32, i32, i32, i32
  }
}

</mosaic_0001>

<llo_original>
// kernel: tpu_custom_call.1
$region0: #{tpu_custom_call.1}
  #allocation0 [shape = 'u32[]', space=smem, size = 0x4, offset = 0x4, fixed_abs, tag = 'smem constant byte address 0x4 - core index']
  #allocation1 [shape = 'u32[144,128]{1,0:T(1,128)}', space=vmem, size = 0x12000, scoped, tag = 'internal scratch']
  %s0 = inlined_call_operand.hbm [shape: f32[2,16,16,128], index: 0, kind: input, shape index: {}]
  %s1 = inlined_call_operand.hbm [shape: f32[2,16,16,128], index: 1, kind: input, shape index: {}]
  %s2 = inlined_call_operand.hbm [shape: f32[2,16,16,128], index: 2, kind: input, shape index: {}]
  %s3 = inlined_call_operand.vmem [shape: f32[9,1,128], index: 3, kind: input, shape index: {}]
  %s4 = inlined_call_operand.vmem [shape: f32[1,128], index: 4, kind: input, shape index: {}]
  %s5 = inlined_call_operand.hbm [shape: f32[2,16,16,128], index: 5, kind: output, shape index: {}]
  %s6 = sld [smem:[#allocation0]]
  $region65: #{tpu_custom_call.1} parent=0
    _
  %s8 = ssub.s32 1, %s6
  %s9 = scalar_select 0, %s8, %s6
  $region1: #{tpu_custom_call.1} parent=0
    #allocation2 [shape = 'u8[16384]{0}', space=vmem, size = 0x4000, scoped, tag = 'input window, operand 0']
    #allocation3 [shape = 's32[2]{0}', space=sflag, size = 0x8, scoped, tag = 'scoped memory for tpu_custom_call.1']
    #allocation4 [shape = 's32[2]{0}', space=sflag, size = 0x8, scoped, tag = 'scoped memory for tpu_custom_call.1']
    #allocation5 [shape = 'u8[131072]{0}', space=vmem, size = 0x20000, scoped, tag = 'input window, operand 1']
    #allocation6 [shape = 's32[2]{0}', space=sflag, size = 0x8, scoped, tag = 'scoped memory for tpu_custom_call.1']
    #allocation7 [shape = 'u8[16384]{0}', space=vmem, size = 0x4000, scoped, tag = 'input window, operand 2']
    #allocation8 [shape = 'u8[131072]{0}', space=vmem, size = 0x20000, scoped, tag = 'output window, operand 0']
    %10 = vsyncpa [#allocation3], 0
    %s11 = scalar_lea.sflag [#allocation3], 1
    %12 = vsyncpa %s11, 0
    %13 = vsyncpa [#allocation6], 0
    %s14 = scalar_lea.sflag [#allocation6], 1
    %15 = vsyncpa %s14, 0
    %16 = vsyncpa [#allocation4], 0
    %s17 = scalar_lea.sflag [#allocation4], 1
    %18 = vsyncpa %s17, 0
    loop: start=0, step=1, limit=6
    $region2: #{tpu_custom_call.1} parent=1 // loop_pre_header
      _
    $region3: #{tpu_custom_call.1} parent=1 // loop_header
      %s20 = sphi 0, %s24
      %p21 = scmp.ge.s32.totalorder %s20, 6
      %s27 = sphi 0, %s39
      %s28 = sphi 0, %s35
      %s29 = sphi 0, %s27
      %s30 = sphi 0, %s28
      %s31 = sphi 0, %s29
      %s32 = sphi 0, %s30
      %s52 = sphi 0, %s54
      %s55 = sphi 0, %s52
      %s56 = sphi 0, %s55
      %s72 = sphi 0, %s56
      %s80 = sphi 0, %s82
      %s83 = sphi 0, %s80
      %s84 = sphi 0, %s83
      %s100 = sphi 0, %s84
      %s116 = sphi 0, %s118
      %s119 = sphi 0, %s116
      %s120 = sphi 0, %s119
      %s136 = sphi 0, %s120
      %s140 = sphi 0, %s140
      %s142 = sphi 0, %s140
      %s143 = sphi 0, %s142
      %s157 = sphi 0, %s143
      %s161 = sphi 0, %s161
      %s163 = sphi 0, %s161
      %s164 = sphi 0, %s163
      %s178 = sphi 0, %s164
      %s186 = sphi 0, %s188
      %s189 = sphi 0, %s186
      %s190 = sphi 0, %s189
      %s206 = sphi 0, %s190
    $region4: #{tpu_custom_call.1} parent=1 // loop_header_branch
      %23 = sbr.rel (%p21) target = $region8
    $region5: #{tpu_custom_call.1} parent=1 // loop_body
      %s25 = ssub.s32 %s20, 1
      %s26 = ssub.s32 %s20, 2
      %s33 = sadd.s32 1, %s28
      %p34 = scmp.ge.s32.totalorder %s33, 2
      %s35 = scalar_select %p34, 0, %s33
      %s36 = sadd.s32 1, %s27
      %s37 = scalar_select %p34, %s36, %s27
      %p38 = scmp.ge.s32.totalorder %s37, 2
      %s39 = scalar_select %p38, 0, %s37
      %s40 = smul.u32 %s28, 8
      %s41 = ssub.s32 %s40, 1
      %p42 = scmp.gt.s32.totalorder %s41, 0
      %s43 = scalar_select %p42, %s41, 0
      %s44 = smul.u32 %s35, 8
      %s45 = ssub.s32 %s44, 1
      %p46 = scmp.gt.s32.totalorder %s45, 0
      %s47 = scalar_select %p46, %s45, 0
      %s48 = ssub.s32 %s27, %s39
      %s49 = ssub.s32 %s43, %s47
      %s50 = sor.u32 %s48, %s49
      %p51 = scmp.eq.s32.totalorder %s50, 0
      %s53 = sadd.s32 %s52, 1
      %s54 = scalar_select %p51, %s52, %s53
      %p57 = pneg %p51
      %p58 = scmp.eq.s32.totalorder %s20, 3
      %p59 = por %p57, %p58
      %p60 = scmp.ne.s32.totalorder %s52, %s55
      %p61 = scmp.eq.s32.totalorder %s20, 0
      %p62 = por %p60, %p61
      %p63 = scmp.ne.s32.totalorder %s52, %s55
      %p64 = scmp.eq.s32.totalorder %s25, 3
      %p65 = por %p63, %p64
      %p66 = scmp.ne.s32.totalorder %s55, %s56
      %p67 = scmp.eq.s32.totalorder %s25, 0
      %p68 = por %p66, %p67
      %p69 = scmp.ne.s32.totalorder %s55, %s56
      %p70 = scmp.eq.s32.totalorder %s26, 3
      %p71 = por %p69, %p70
      %p73 = scmp.ne.s32.totalorder %s56, %s72
      %p74 = scmp.eq.s32.totalorder %s26, 0
      %p75 = por %p73, %p74
      %s76 = ssub.s32 %s27, %s39
      %s77 = ssub.s32 %s28, %s35
      %s78 = sor.u32 %s76, %s77
      %p79 = scmp.eq.s32.totalorder %s78, 0
      %s81 = sadd.s32 %s80, 1
      %s82 = scalar_select %p79, %s80, %s81
      %p85 = pneg %p79
      %p86 = scmp.eq.s32.totalorder %s20, 3
      %p87 = por %p85, %p86
      %p88 = scmp.ne.s32.totalorder %s80, %s83
      %p89 = scmp.eq.s32.totalorder %s20, 0
      %p90 = por %p88, %p89
      %p91 = scmp.ne.s32.totalorder %s80, %s83
      %p92 = scmp.eq.s32.totalorder %s25, 3
      %p93 = por %p91, %p92
      %p94 = scmp.ne.s32.totalorder %s83, %s84
      %p95 = scmp.eq.s32.totalorder %s25, 0
      %p96 = por %p94, %p95
      %p97 = scmp.ne.s32.totalorder %s83, %s84
      %p98 = scmp.eq.s32.totalorder %s26, 3
      %p99 = por %p97, %p98
      %p101 = scmp.ne.s32.totalorder %s84, %s100
      %p102 = scmp.eq.s32.totalorder %s26, 0
      %p103 = por %p101, %p102
      %s104 = sadd.s32 %s28, 1
      %s105 = smul.u32 %s104, 8
      %p106 = scmp.lt.s32.totalorder %s105, 15
      %s107 = scalar_select %p106, %s105, 15
      %s108 = sadd.s32 %s35, 1
      %s109 = smul.u32 %s108, 8
      %p110 = scmp.lt.s32.totalorder %s109, 15
      %s111 = scalar_select %p110, %s109, 15
      %s112 = ssub.s32 %s27, %s39
      %s113 = ssub.s32 %s107, %s111
      %s114 = sor.u32 %s112, %s113
      %p115 = scmp.eq.s32.totalorder %s114, 0
      %s117 = sadd.s32 %s116, 1
      %s118 = scalar_select %p115, %s116, %s117
      %p121 = pneg %p115
      %p122 = scmp.eq.s32.totalorder %s20, 3
      %p123 = por %p121, %p122
      %p124 = scmp.ne.s32.totalorder %s116, %s119
      %p125 = scmp.eq.s32.totalorder %s20, 0
      %p126 = por %p124, %p125
      %p127 = scmp.ne.s32.totalorder %s116, %s119
      %p128 = scmp.eq.s32.totalorder %s25, 3
      %p129 = por %p127, %p128
      %p130 = scmp.ne.s32.totalorder %s119, %s120
      %p131 = scmp.eq.s32.totalorder %s25, 0
      %p132 = por %p130, %p131
      %p133 = scmp.ne.s32.totalorder %s119, %s120
      %p134 = scmp.eq.s32.totalorder %s26, 3
      %p135 = por %p133, %p134
      %p137 = scmp.ne.s32.totalorder %s120, %s136
      %p138 = scmp.eq.s32.totalorder %s26, 0
      %p139 = por %p137, %p138
      %s141 = sadd.s32 %s140, 1
      %p144 = scmp.eq.s32.totalorder %s20, 3
      %p145 = scmp.ne.s32.totalorder %s140, %s142
      %p146 = scmp.eq.s32.totalorder %s20, 0
      %p147 = por %p145, %p146
      %p148 = scmp.ne.s32.totalorder %s140, %s142
      %p149 = scmp.eq.s32.totalorder %s25, 3
      %p150 = por %p148, %p149
      %p151 = scmp.ne.s32.totalorder %s142, %s143
      %p152 = scmp.eq.s32.totalorder %s25, 0
      %p153 = por %p151, %p152
      %p154 = scmp.ne.s32.totalorder %s142, %s143
      %p155 = scmp.eq.s32.totalorder %s26, 3
      %p156 = por %p154, %p155
      %p158 = scmp.ne.s32.totalorder %s143, %s157
      %p159 = scmp.eq.s32.totalorder %s26, 0
      %p160 = por %p158, %p159
      %s162 = sadd.s32 %s161, 1
      %p165 = scmp.eq.s32.totalorder %s20, 3
      %p166 = scmp.ne.s32.totalorder %s161, %s163
      %p167 = scmp.eq.s32.totalorder %s20, 0
      %p168 = por %p166, %p167
      %p169 = scmp.ne.s32.totalorder %s161, %s163
      %p170 = scmp.eq.s32.totalorder %s25, 3
      %p171 = por %p169, %p170
      %p172 = scmp.ne.s32.totalorder %s163, %s164
      %p173 = scmp.eq.s32.totalorder %s25, 0
      %p174 = por %p172, %p173
      %p175 = scmp.ne.s32.totalorder %s163, %s164
      %p176 = scmp.eq.s32.totalorder %s26, 3
      %p177 = por %p175, %p176
      %p179 = scmp.ne.s32.totalorder %s164, %s178
      %p180 = scmp.eq.s32.totalorder %s26, 0
      %p181 = por %p179, %p180
      %s182 = ssub.s32 %s27, %s39
      %s183 = ssub.s32 %s28, %s35
      %s184 = sor.u32 %s182, %s183
      %p185 = scmp.eq.s32.totalorder %s184, 0
      %s187 = sadd.s32 %s186, 1
      %s188 = scalar_select %p185, %s186, %s187
      %p191 = pneg %p185
      %p192 = scmp.eq.s32.totalorder %s20, 3
      %p193 = por %p191, %p192
      %p194 = scmp.ne.s32.totalorder %s186, %s189
      %p195 = scmp.eq.s32.totalorder %s20, 0
      %p196 = por %p194, %p195
      %p197 = scmp.ne.s32.totalorder %s186, %s189
      %p198 = scmp.eq.s32.totalorder %s25, 3
      %p199 = por %p197, %p198
      %p200 = scmp.ne.s32.totalorder %s189, %s190
      %p201 = scmp.eq.s32.totalorder %s25, 0
      %p202 = por %p200, %p201
      %p203 = scmp.ne.s32.totalorder %s189, %s190
      %p204 = scmp.eq.s32.totalorder %s26, 3
      %p205 = por %p203, %p204
      %p207 = scmp.ne.s32.totalorder %s190, %s206
      %p208 = scmp.eq.s32.totalorder %s26, 0
      %p209 = por %p207, %p208
      %p210 = scmp.le.s32.totalorder 1, %s20
      %p211 = scmp.lt.s32.totalorder %s20, 5
      %p212 = pnand %p210, %p211
      %p213 = pneg %p212
      // Predicated region
      $region9: #{tpu_custom_call.1} parent=5 // pred_check
        _
      $region10: #{tpu_custom_call.1} parent=5 // pred_check_branch
        %215 = sbr.rel (%p212) target = $region12
      $region11: #{tpu_custom_call.1} parent=5 // pred_region
        %s216 = ssub.s32 %s20, 1
        // Predicated region
        $region13: #{tpu_custom_call.1} parent=11 // pred_check
          %p217 = pneg %p153
        $region14: #{tpu_custom_call.1} parent=11 // pred_check_branch
          %219 = sbr.rel (%p217) target = $region16
        $region15: #{tpu_custom_call.1} parent=11 // pred_region
          _
        $region16: #{tpu_custom_call.1} parent=11 // pred_fallthru
          _
        // Predicated region
        $region17: #{tpu_custom_call.1} parent=11 // pred_check
          %p220 = pneg %p174
        $region18: #{tpu_custom_call.1} parent=11 // pred_check_branch
          %222 = sbr.rel (%p220) target = $region20
        $region19: #{tpu_custom_call.1} parent=11 // pred_region
          _
        $region20: #{tpu_custom_call.1} parent=11 // pred_fallthru
          _
      $region12: #{tpu_custom_call.1} parent=5 // pred_fallthru
        _
      %p223 = scmp.lt.s32.totalorder %s20, 4
      // Predicated region
      $region21: #{tpu_custom_call.1} parent=5 // pred_check
        %p224 = pneg %p223
      $region22: #{tpu_custom_call.1} parent=5 // pred_check_branch
        %226 = sbr.rel (%p224) target = $region24
      $region23: #{tpu_custom_call.1} parent=5 // pred_region
        // Predicated region
        $region25: #{tpu_custom_call.1} parent=23 // pred_check
          %p227 = pneg %p62
        $region26: #{tpu_custom_call.1} parent=23 // pred_check_branch
          %229 = sbr.rel (%p227) target = $region28
        $region27: #{tpu_custom_call.1} parent=23 // pred_region
          %s230 = sand.u32 %s52, 1
          %s231 = scalar_lea.sflag [#allocation3], %s230
          %s232 = sand.u32 %s52, 1
          %s233 = smul.addr %s232, 16
          %s234 = scalar_lea.vmem [#allocation2], %s233
          %s235 = smul.u32 %s28, 8
          %s236 = ssub.s32 %s235, 1
          %p237 = scmp.gt.s32.totalorder %s236, 0
          %s238 = scalar_select %p237, %s236, 0
          %s240 = ssub.s32 256, 256
          %241 = vsyncadd %s231, %s240
          %s242 = smul.addr %s238, 2
          %s243 = smul.addr %s27, 32
          %s244 = sadd.s32 %s242, %s243
          %s245 = smul.addr %s244, 128
          %s246 = scalar_lea.hbm %s0, %s245
          %s247 = sshll.u32 %s234, 4
          %s248 = int_to_ptr.vmem [resolvable:$true] %s247
          %253 = dma.hbm_to_vmem [thread:$0]  %s246, 256, %s248, %s231, 128, 128, 8
        $region28: #{tpu_custom_call.1} parent=23 // pred_fallthru
          _
        // Predicated region
        $region29: #{tpu_custom_call.1} parent=23 // pred_check
          %p254 = pneg %p90
        $region30: #{tpu_custom_call.1} parent=23 // pred_check_branch
          %256 = sbr.rel (%p254) target = $region32
        $region31: #{tpu_custom_call.1} parent=23 // pred_region
          %s257 = sand.u32 %s20, 1
          %s258 = scalar_lea.sflag [#allocation6], %s257
          %s259 = sand.u32 %s80, 1
          %s260 = smul.addr %s259, 128
          %s261 = scalar_lea.vmem [#allocation5], %s260
          %s262 = smul.u32 8, %s28
          %s264 = ssub.s32 2048, 2048
          %265 = vsyncadd %s258, %s264
          %s266 = smul.addr %s262, 2
          %s267 = smul.addr %s27, 32
          %s268 = sadd.s32 %s266, %s267
          %s269 = smul.addr %s268, 128
          %s270 = scalar_lea.hbm %s1, %s269
          %s271 = sshll.u32 %s261, 4
          %s272 = int_to_ptr.vmem [resolvable:$true] %s271
          %277 = dma.hbm_to_vmem [thread:$0]  %s270, 2048, %s272, %s258, 128, 128, 8
        $region32: #{tpu_custom_call.1} parent=23 // pred_fallthru
          _
        // Predicated region
        $region33: #{tpu_custom_call.1} parent=23 // pred_check
          %p278 = pneg %p126
        $region34: #{tpu_custom_call.1} parent=23 // pred_check_branch
          %280 = sbr.rel (%p278) target = $region36
        $region35: #{tpu_custom_call.1} parent=23 // pred_region
          %s281 = sand.u32 %s20, 1
          %s282 = scalar_lea.sflag [#allocation6], %s281
          %s283 = sand.u32 %s116, 1
          %s284 = smul.addr %s283, 16
          %s285 = scalar_lea.vmem [#allocation7], %s284
          %s286 = sadd.s32 %s28, 1
          %s287 = smul.u32 %s286, 8
          %p288 = scmp.lt.s32.totalorder %s287, 15
          %s289 = scalar_select %p288, %s287, 15
          %s291 = ssub.s32 256, 256
          %292 = vsyncadd %s282, %s291
          %s293 = smul.addr %s289, 2
          %s294 = smul.addr %s27, 32
          %s295 = sadd.s32 %s293, %s294
          %s296 = smul.addr %s295, 128
          %s297 = scalar_lea.hbm %s2, %s296
          %s298 = sshll.u32 %s285, 4
          %s299 = int_to_ptr.vmem [resolvable:$true] %s298
          %304 = dma.hbm_to_vmem [thread:$0]  %s297, 256, %s299, %s282, 128, 128, 8
        $region36: #{tpu_custom_call.1} parent=23 // pred_fallthru
          _
      $region24: #{tpu_custom_call.1} parent=5 // pred_fallthru
        _
      %p305 = scmp.le.s32.totalorder 1, %s20
      %p306 = scmp.lt.s32.totalorder %s20, 5
      %p307 = pnand %p305, %p306
      %p308 = pneg %p307
      // Predicated region
      $region37: #{tpu_custom_call.1} parent=5 // pred_check
        _
      $region38: #{tpu_custom_call.1} parent=5 // pred_check_branch
        %310 = sbr.rel (%p307) target = $region40
      $region39: #{tpu_custom_call.1} parent=5 // pred_region
        %s311 = ssub.s32 %s20, 1
        %s312 = sand.u32 %s55, 1
        %s313 = scalar_lea.sflag [#allocation3], %s312
        %s314 = sand.u32 %s55, 1
        %s315 = smul.addr %s314, 16
        %s316 = scalar_lea.vmem [#allocation2], %s315
        // Predicated region
        $region41: #{tpu_custom_call.1} parent=39 // pred_check
          %p317 = pneg %p68
        $region42: #{tpu_custom_call.1} parent=39 // pred_check_branch
          %319 = sbr.rel (%p317) target = $region44
        $region43: #{tpu_custom_call.1} parent=39 // pred_region
          %320 = dma.done %s313, 256
        $region44: #{tpu_custom_call.1} parent=39 // pred_fallthru
          _
        %s321 = sand.u32 %s25, 1
        %s322 = scalar_lea.sflag [#allocation6], %s321
        %s323 = sand.u32 %s83, 1
        %s324 = smul.addr %s323, 128
        %s325 = scalar_lea.vmem [#allocation5], %s324
        // Predicated region
        $region45: #{tpu_custom_call.1} parent=39 // pred_check
          %p326 = pneg %p96
        $region46: #{tpu_custom_call.1} parent=39 // pred_check_branch
          %328 = sbr.rel (%p326) target = $region48
        $region47: #{tpu_custom_call.1} parent=39 // pred_region
          %329 = dma.done %s322, 2048
        $region48: #{tpu_custom_call.1} parent=39 // pred_fallthru
          _
        %s330 = sand.u32 %s25, 1
        %s331 = scalar_lea.sflag [#allocation6], %s330
        %s332 = sand.u32 %s119, 1
        %s333 = smul.addr %s332, 16
        %s334 = scalar_lea.vmem [#allocation7], %s333
        // Predicated region
        $region49: #{tpu_custom_call.1} parent=39 // pred_check
          %p335 = pneg %p132
        $region50: #{tpu_custom_call.1} parent=39 // pred_check_branch
          %337 = sbr.rel (%p335) target = $region52
        $region51: #{tpu_custom_call.1} parent=39 // pred_region
          %338 = dma.done %s331, 256
        $region52: #{tpu_custom_call.1} parent=39 // pred_fallthru
          _
        %s339 = sand.u32 %s55, 1
        %s340 = scalar_lea.sflag [#allocation3], %s339
        %s341 = sand.u32 %s55, 1
        %s342 = smul.addr %s341, 16
        %s343 = scalar_lea.vmem [#allocation2], %s342
        %p344 = pneg %p68
        %p345 = pneg %p65
        %s346 = sand.u32 %s25, 1
        %s347 = scalar_lea.sflag [#allocation6], %s346
        %s348 = sand.u32 %s83, 1
        %s349 = smul.addr %s348, 128
        %s350 = scalar_lea.vmem [#allocation5], %s349
        %p351 = pneg %p96
        %p352 = pneg %p93
        %s353 = sand.u32 %s25, 1
        %s354 = scalar_lea.sflag [#allocation6], %s353
        %s355 = sand.u32 %s119, 1
        %s356 = smul.addr %s355, 16
        %s357 = scalar_lea.vmem [#allocation7], %s356
        %p358 = pneg %p132
        %p359 = pneg %p129
        %p360 = pneg %p153
        %p361 = pneg %p150
        %p362 = pneg %p174
        %p363 = pneg %p171
        %p364 = pneg %p202
        %p365 = pneg %p199
        %s366 = sand.u32 %s189, 1
        %s367 = scalar_lea.sflag [#allocation4], %s366
        %s368 = sand.u32 %s189, 1
        %s369 = smul.addr %s368, 128
        %s370 = scalar_lea.vmem [#allocation8], %s369
        %s371 = smul.u32 %s30, 8
        %s372 = ssub.s32 %s371, 1
        %p373 = scmp.gt.s32.totalorder %s372, 0
        %s374 = scalar_select %p373, %s372, 0
        %s375 = smul.u32 8, %s30
        %s376 = sadd.s32 %s30, 1
        %s377 = smul.u32 %s376, 8
        %p378 = scmp.lt.s32.totalorder %s377, 15
        %s379 = scalar_select %p378, %s377, 15
        %s380 = smul.u32 8, %s30
        %v381 = vld [vmem:[%s3] sm:$0x1]
        %v382 = vld [vmem:[%s3 + $0x1] sm:$0x1]
        %v383 = vld [vmem:[%s3 + $0x2] sm:$0x1]
        %v384 = vld [vmem:[%s3 + $0x3] sm:$0x1]
        %v385 = vld [vmem:[%s3 + $0x4] sm:$0x1]
        %v386 = vld [vmem:[%s3 + $0x5] sm:$0x1]
        %v387 = vld [vmem:[%s3 + $0x6] sm:$0x1]
        %v388 = vld [vmem:[%s3 + $0x7] sm:$0x1]
        %v389 = vld [vmem:[%s3 + $0x8] sm:$0x1]
        %v390 = vld [vmem:[%s4] sm:$0x1]
        %v391 = vld [vmem:[%s325] sm:$0xff]
        %v392 = vld [vmem:[%s325 + $0x8] sm:$0xff]
        %v393 = vld [vmem:[%s325 + $0x10] sm:$0xff]
        %v394 = vld [vmem:[%s325 + $0x18] sm:$0xff]
        %v395 = vld [vmem:[%s325 + $0x20] sm:$0xff]
        %v396 = vld [vmem:[%s325 + $0x28] sm:$0xff]
        %v397 = vld [vmem:[%s325 + $0x30] sm:$0xff]
        %v398 = vld [vmem:[%s325 + $0x38] sm:$0xff]
        %v399 = vld [vmem:[%s325 + $0x40] sm:$0xff]
        %v400 = vld [vmem:[%s325 + $0x48] sm:$0xff]
        %v401 = vld [vmem:[%s325 + $0x50] sm:$0xff]
        %v402 = vld [vmem:[%s325 + $0x58] sm:$0xff]
        %v403 = vld [vmem:[%s325 + $0x60] sm:$0xff]
        %v404 = vld [vmem:[%s325 + $0x68] sm:$0xff]
        %v405 = vld [vmem:[%s325 + $0x70] sm:$0xff]
        %v406 = vld [vmem:[%s325 + $0x78] sm:$0xff]
        %v407 = vld [vmem:[%s316] sm:$0xff]
        %v408 = vld [vmem:[%s316 + $0x8] sm:$0xff]
        %v409 = vld [vmem:[%s334] sm:$0xff]
        %v410 = vld [vmem:[%s334 + $0x8] sm:$0xff]
        %v411 = vstv %s30
        %vm412 = vcmp.gt.s32.totalorder %v411, 0
        %v413 = vsel %vm412, %v407, 0.0
        %v414 = vsel %vm412, %v408, 0.0
        %vm415 = vcmp.lt.s32.totalorder %v411, 1
        %v416 = vsel %vm415, %v409, 0.0
        %v417 = vsel %vm415, %v410, 0.0
        %v419 = vlaneseq
        %v420 = vshrl.u32 %v419, 7
        %v421 = vsub.s32 0, %v420
        %v422 = vrot.slane %v384, %v421
        %v424 = vmul.f32 %v391, %v422
        %v425 = vmul.f32 %v392, %v422
        %v427 = vlaneseq
        %v428 = vshrl.u32 %v427, 7
        %v429 = vsub.s32 0, %v428
        %v430 = vrot.slane %v381, %v429
        %v432 = vmul.f32 %v413, %v430
        %v433 = vmul.f32 %v414, %v430
        %v434 = vadd.f32 %v424, %v432
        %v435 = vadd.f32 %v425, %v433
        %v437 = vlaneseq
        %v438 = vshrl.u32 %v437, 7
        %v439 = vsub.s32 0, %v438
        %v440 = vrot.slane %v387, %v439
        %v442 = vmul.f32 %v393, %v440
        %v443 = vmul.f32 %v394, %v440
        %v444 = vadd.f32 %v434, %v442
        %v445 = vadd.f32 %v435, %v443
        %v446 = vmul.f32 %v405, %v422
        %v447 = vmul.f32 %v406, %v422
        %v448 = vmul.f32 %v403, %v430
        %v449 = vmul.f32 %v404, %v430
        %v450 = vadd.f32 %v446, %v448
        %v451 = vadd.f32 %v447, %v449
        %v452 = vmul.f32 %v416, %v440
        %v453 = vmul.f32 %v417, %v440
        %v454 = vadd.f32 %v450, %v452
        %v455 = vadd.f32 %v451, %v453
        %v456 = vmul.f32 %v393, %v422
        %v457 = vmul.f32 %v394, %v422
        %v458 = vmul.f32 %v395, %v422
        %v459 = vmul.f32 %v396, %v422
        %v460 = vmul.f32 %v397, %v422
        %v461 = vmul.f32 %v398, %v422
        %v462 = vmul.f32 %v399, %v422
        %v463 = vmul.f32 %v400, %v422
        %v464 = vmul.f32 %v401, %v422
        %v465 = vmul.f32 %v402, %v422
        %v466 = vmul.f32 %v403, %v422
        %v467 = vmul.f32 %v404, %v422
        %v468 = vmul.f32 %v391, %v430
        %v469 = vmul.f32 %v392, %v430
        %v470 = vmul.f32 %v393, %v430
        %v471 = vmul.f32 %v394, %v430
        %v472 = vmul.f32 %v395, %v430
        %v473 = vmul.f32 %v396, %v430
        %v474 = vmul.f32 %v397, %v430
        %v475 = vmul.f32 %v398, %v430
        %v476 = vmul.f32 %v399, %v430
        %v477 = vmul.f32 %v400, %v430
        %v478 = vmul.f32 %v401, %v430
        %v479 = vmul.f32 %v402, %v430
        %v480 = vadd.f32 %v456, %v468
        %v481 = vadd.f32 %v457, %v469
        %v482 = vadd.f32 %v458, %v470
        %v483 = vadd.f32 %v459, %v471
        %v484 = vadd.f32 %v460, %v472
        %v485 = vadd.f32 %v461, %v473
        %v486 = vadd.f32 %v462, %v474
        %v487 = vadd.f32 %v463, %v475
        %v488 = vadd.f32 %v464, %v476
        %v489 = vadd.f32 %v465, %v477
        %v490 = vadd.f32 %v466, %v478
        %v491 = vadd.f32 %v467, %v479
        %v492 = vmul.f32 %v395, %v440
        %v493 = vmul.f32 %v396, %v440
        %v494 = vmul.f32 %v397, %v440
        %v495 = vmul.f32 %v398, %v440
        %v496 = vmul.f32 %v399, %v440
        %v497 = vmul.f32 %v400, %v440
        %v498 = vmul.f32 %v401, %v440
        %v499 = vmul.f32 %v402, %v440
        %v500 = vmul.f32 %v403, %v440
        %v501 = vmul.f32 %v404, %v440
        %v502 = vmul.f32 %v405, %v440
        %v503 = vmul.f32 %v406, %v440
        %v504 = vadd.f32 %v480, %v492
        %v505 = vadd.f32 %v481, %v493
        %v506 = vadd.f32 %v482, %v494
        %v507 = vadd.f32 %v483, %v495
        %v508 = vadd.f32 %v484, %v496
        %v509 = vadd.f32 %v485, %v497
        %v510 = vadd.f32 %v486, %v498
        %v511 = vadd.f32 %v487, %v499
        %v512 = vadd.f32 %v488, %v500
        %v513 = vadd.f32 %v489, %v501
        %v514 = vadd.f32 %v490, %v502
        %v515 = vadd.f32 %v491, %v503
        %v517 = vlaneseq
        %v518 = vshrl.u32 %v517, 7
        %v519 = vsub.s32 0, %v518
        %v520 = vrot.slane %v385, %v519
        %v522 = vmul.f32 %v391, %v520
        %v523 = vmul.f32 %v392, %v520
        %v525 = vlaneseq
        %v526 = vshrl.u32 %v525, 7
        %v527 = vsub.s32 0, %v526
        %v528 = vrot.slane %v382, %v527
        %v530 = vmul.f32 %v413, %v528
        %v531 = vmul.f32 %v414, %v528
        %v532 = vadd.f32 %v522, %v530
        %v533 = vadd.f32 %v523, %v531
        %v535 = vlaneseq
        %v536 = vshrl.u32 %v535, 7
        %v537 = vsub.s32 0, %v536
        %v538 = vrot.slane %v388, %v537
        %v540 = vmul.f32 %v393, %v538
        %v541 = vmul.f32 %v394, %v538
        %v542 = vadd.f32 %v532, %v540
        %v543 = vadd.f32 %v533, %v541
        %v544 = vmul.f32 %v405, %v520
        %v545 = vmul.f32 %v406, %v520
        %v546 = vmul.f32 %v403, %v528
        %v547 = vmul.f32 %v404, %v528
        %v548 = vadd.f32 %v544, %v546
        %v549 = vadd.f32 %v545, %v547
        %v550 = vmul.f32 %v416, %v538
        %v551 = vmul.f32 %v417, %v538
        %v552 = vadd.f32 %v548, %v550
        %v553 = vadd.f32 %v549, %v551
        %v554 = vmul.f32 %v393, %v520
        %v555 = vmul.f32 %v394, %v520
        %v556 = vmul.f32 %v395, %v520
        %v557 = vmul.f32 %v396, %v520
        %v558 = vmul.f32 %v397, %v520
        %v559 = vmul.f32 %v398, %v520
        %v560 = vmul.f32 %v399, %v520
        %v561 = vmul.f32 %v400, %v520
        %v562 = vmul.f32 %v401, %v520
        %v563 = vmul.f32 %v402, %v520
        %v564 = vmul.f32 %v403, %v520
        %v565 = vmul.f32 %v404, %v520
        %v566 = vmul.f32 %v391, %v528
        %v567 = vmul.f32 %v392, %v528
        %v568 = vmul.f32 %v393, %v528
        %v569 = vmul.f32 %v394, %v528
        %v570 = vmul.f32 %v395, %v528
        %v571 = vmul.f32 %v396, %v528
        %v572 = vmul.f32 %v397, %v528
        %v573 = vmul.f32 %v398, %v528
        %v574 = vmul.f32 %v399, %v528
        %v575 = vmul.f32 %v400, %v528
        %v576 = vmul.f32 %v401, %v528
        %v577 = vmul.f32 %v402, %v528
        %v578 = vadd.f32 %v554, %v566
        %v579 = vadd.f32 %v555, %v567
        %v580 = vadd.f32 %v556, %v568
        %v581 = vadd.f32 %v557, %v569
        %v582 = vadd.f32 %v558, %v570
        %v583 = vadd.f32 %v559, %v571
        %v584 = vadd.f32 %v560, %v572
        %v585 = vadd.f32 %v561, %v573
        %v586 = vadd.f32 %v562, %v574
        %v587 = vadd.f32 %v563, %v575
        %v588 = vadd.f32 %v564, %v576
        %v589 = vadd.f32 %v565, %v577
        %v590 = vmul.f32 %v395, %v538
        %v591 = vmul.f32 %v396, %v538
        %v592 = vmul.f32 %v397, %v538
        %v593 = vmul.f32 %v398, %v538
        %v594 = vmul.f32 %v399, %v538
        %v595 = vmul.f32 %v400, %v538
        %v596 = vmul.f32 %v401, %v538
        %v597 = vmul.f32 %v402, %v538
        %v598 = vmul.f32 %v403, %v538
        %v599 = vmul.f32 %v404, %v538
        %v600 = vmul.f32 %v405, %v538
        %v601 = vmul.f32 %v406, %v538
        %v602 = vadd.f32 %v578, %v590
        %v603 = vadd.f32 %v579, %v591
        %v604 = vadd.f32 %v580, %v592
        %v605 = vadd.f32 %v581, %v593
        %v606 = vadd.f32 %v582, %v594
        %v607 = vadd.f32 %v583, %v595
        %v608 = vadd.f32 %v584, %v596
        %v609 = vadd.f32 %v585, %v597
        %v610 = vadd.f32 %v586, %v598
        %v611 = vadd.f32 %v587, %v599
        %v612 = vadd.f32 %v588, %v600
        %v613 = vadd.f32 %v589, %v601
        %v615 = vlaneseq
        %v616 = vshrl.u32 %v615, 7
        %v617 = vsub.s32 0, %v616
        %v618 = vrot.slane %v386, %v617
        %v620 = vmul.f32 %v391, %v618
        %v621 = vmul.f32 %v392, %v618
        %v623 = vlaneseq
        %v624 = vshrl.u32 %v623, 7
        %v625 = vsub.s32 0, %v624
        %v626 = vrot.slane %v383, %v625
        %v628 = vmul.f32 %v413, %v626
        %v629 = vmul.f32 %v414, %v626
        %v630 = vadd.f32 %v620, %v628
        %v631 = vadd.f32 %v621, %v629
        %v633 = vlaneseq
        %v634 = vshrl.u32 %v633, 7
        %v635 = vsub.s32 0, %v634
        %v636 = vrot.slane %v389, %v635
        %v638 = vmul.f32 %v393, %v636
        %v639 = vmul.f32 %v394, %v636
        %v640 = vadd.f32 %v630, %v638
        %v641 = vadd.f32 %v631, %v639
        %v642 = vmul.f32 %v405, %v618
        %v643 = vmul.f32 %v406, %v618
        %v644 = vmul.f32 %v403, %v626
        %v645 = vmul.f32 %v404, %v626
        %v646 = vadd.f32 %v642, %v644
        %v647 = vadd.f32 %v643, %v645
        %v648 = vmul.f32 %v416, %v636
        %v649 = vmul.f32 %v417, %v636
        %v650 = vadd.f32 %v646, %v648
        %v651 = vadd.f32 %v647, %v649
        %v652 = vmul.f32 %v393, %v618
        %v653 = vmul.f32 %v394, %v618
        %v654 = vmul.f32 %v395, %v618
        %v655 = vmul.f32 %v396, %v618
        %v656 = vmul.f32 %v397, %v618
        %v657 = vmul.f32 %v398, %v618
        %v658 = vmul.f32 %v399, %v618
        %v659 = vmul.f32 %v400, %v618
        %v660 = vmul.f32 %v401, %v618
        %v661 = vmul.f32 %v402, %v618
        %v662 = vmul.f32 %v403, %v618
        %v663 = vmul.f32 %v404, %v618
        %v664 = vmul.f32 %v391, %v626
        %v665 = vmul.f32 %v392, %v626
        %v666 = vmul.f32 %v393, %v626
        %v667 = vmul.f32 %v394, %v626
        %v668 = vmul.f32 %v395, %v626
        %v669 = vmul.f32 %v396, %v626
        %v670 = vmul.f32 %v397, %v626
        %v671 = vmul.f32 %v398, %v626
        %v672 = vmul.f32 %v399, %v626
        %v673 = vmul.f32 %v400, %v626
        %v674 = vmul.f32 %v401, %v626
        %v675 = vmul.f32 %v402, %v626
        %v676 = vadd.f32 %v652, %v664
        %v677 = vadd.f32 %v653, %v665
        %v678 = vadd.f32 %v654, %v666
        %v679 = vadd.f32 %v655, %v667
        %v680 = vadd.f32 %v656, %v668
        %v681 = vadd.f32 %v657, %v669
        %v682 = vadd.f32 %v658, %v670
        %v683 = vadd.f32 %v659, %v671
        %v684 = vadd.f32 %v660, %v672
        %v685 = vadd.f32 %v661, %v673
        %v686 = vadd.f32 %v662, %v674
        %v687 = vadd.f32 %v663, %v675
        %v688 = vmul.f32 %v395, %v636
        %v689 = vmul.f32 %v396, %v636
        %v690 = vmul.f32 %v397, %v636
        %v691 = vmul.f32 %v398, %v636
        %v692 = vmul.f32 %v399, %v636
        %v693 = vmul.f32 %v400, %v636
        %v694 = vmul.f32 %v401, %v636
        %v695 = vmul.f32 %v402, %v636
        %v696 = vmul.f32 %v403, %v636
        %v697 = vmul.f32 %v404, %v636
        %v698 = vmul.f32 %v405, %v636
        %v699 = vmul.f32 %v406, %v636
        %v700 = vadd.f32 %v676, %v688
        %v701 = vadd.f32 %v677, %v689
        %v702 = vadd.f32 %v678, %v690
        %v703 = vadd.f32 %v679, %v691
        %v704 = vadd.f32 %v680, %v692
        %v705 = vadd.f32 %v681, %v693
        %v706 = vadd.f32 %v682, %v694
        %v707 = vadd.f32 %v683, %v695
        %v708 = vadd.f32 %v684, %v696
        %v709 = vadd.f32 %v685, %v697
        %v710 = vadd.f32 %v686, %v698
        %v711 = vadd.f32 %v687, %v699
        %v713 = vlaneseq
        %v714 = vshrl.u32 %v713, 7
        %v715 = vsub.s32 0, %v714
        %v716 = vrot.slane %v390, %v715
        %v718 = vadd.f32 %v542, %v716
        %v719 = vadd.f32 %v543, %v716
        %v720 = vadd.f32 %v602, %v716
        %v721 = vadd.f32 %v603, %v716
        %v722 = vadd.f32 %v604, %v716
        %v723 = vadd.f32 %v605, %v716
        %v724 = vadd.f32 %v606, %v716
        %v725 = vadd.f32 %v607, %v716
        %v726 = vadd.f32 %v608, %v716
        %v727 = vadd.f32 %v609, %v716
        %v728 = vadd.f32 %v610, %v716
        %v729 = vadd.f32 %v611, %v716
        %v730 = vadd.f32 %v612, %v716
        %v731 = vadd.f32 %v613, %v716
        %v732 = vadd.f32 %v552, %v716
        %v733 = vadd.f32 %v553, %v716
        %v734 = vlaneseq
        %v735 = vshrl.u32 %v734, 7
        %v736 = vadd.s32 %v735, 8
        %vm737 = vcmp.eq.s32.totalorder %v735, 0
        %vm738 = vcmp.eq.s32.totalorder %v736, 0
        %v739 = vrot.slane %v444, 7
        %v740 = vrot.slane %v504, 7
        %v741 = vrot.slane %v506, 7
        %v742 = vrot.slane %v508, 7
        %v743 = vrot.slane %v510, 7
        %v744 = vrot.slane %v512, 7
        %v745 = vrot.slane %v514, 7
        %v746 = vrot.slane %v454, 7
        %v747 = vrot.slane %v445, 7
        %v748 = vrot.slane %v505, 7
        %v749 = vrot.slane %v507, 7
        %v750 = vrot.slane %v509, 7
        %v751 = vrot.slane %v511, 7
        %v752 = vrot.slane %v513, 7
        %v753 = vrot.slane %v515, 7
        %v754 = vrot.slane %v455, 7
        %vm755 = vcmp.lt.s32.totalorder %v735, 1
        %v756 = vsel %vm755, %v739, %v747
        %v757 = vsel %vm755, %v740, %v748
        %v758 = vsel %vm755, %v741, %v749
        %v759 = vsel %vm755, %v742, %v750
        %v760 = vsel %vm755, %v743, %v751
        %v761 = vsel %vm755, %v744, %v752
        %v762 = vsel %vm755, %v745, %v753
        %v763 = vsel %vm755, %v746, %v754
        %v764 = vsel %vm755, %v747, %v739
        %v765 = vsel %vm755, %v748, %v740
        %v766 = vsel %vm755, %v749, %v741
        %v767 = vsel %vm755, %v750, %v742
        %v768 = vsel %vm755, %v751, %v743
        %v769 = vsel %vm755, %v752, %v744
        %v770 = vsel %vm755, %v753, %v745
        %v771 = vsel %vm755, %v754, %v746
        %v772 = vsel %vm737, 1, 0
        %v773 = vsel %vm738, 1, 0
        %vm774 = vcmp.eq.s32.totalorder %v772, 1
        %vm775 = vcmp.eq.s32.totalorder %v773, 1
        %v776 = vsel %vm774, 0.0, %v764
        %v777 = vsel %vm775, 0.0, %v756
        %v778 = vsel %vm774, 0.0, %v765
        %v779 = vsel %vm775, 0.0, %v757
        %v780 = vsel %vm774, 0.0, %v766
        %v781 = vsel %vm775, 0.0, %v758
        %v782 = vsel %vm774, 0.0, %v767
        %v783 = vsel %vm775, 0.0, %v759
        %v784 = vsel %vm774, 0.0, %v768
        %v785 = vsel %vm775, 0.0, %v760
        %v786 = vsel %vm774, 0.0, %v769
        %v787 = vsel %vm775, 0.0, %v761
        %v788 = vsel %vm774, 0.0, %v770
        %v789 = vsel %vm775, 0.0, %v762
        %v790 = vsel %vm774, 0.0, %v771
        %v791 = vsel %vm775, 0.0, %v763
        %vm792 = vcmp.eq.s32.totalorder %v735, 15
        %vm793 = vcmp.eq.s32.totalorder %v736, 15
        %v794 = vrot.slane %v640, 1
        %v795 = vrot.slane %v700, 1
        %v796 = vrot.slane %v702, 1
        %v797 = vrot.slane %v704, 1
        %v798 = vrot.slane %v706, 1
        %v799 = vrot.slane %v708, 1
        %v800 = vrot.slane %v710, 1
        %v801 = vrot.slane %v650, 1
        %v802 = vrot.slane %v641, 1
        %v803 = vrot.slane %v701, 1
        %v804 = vrot.slane %v703, 1
        %v805 = vrot.slane %v705, 1
        %v806 = vrot.slane %v707, 1
        %v807 = vrot.slane %v709, 1
        %v808 = vrot.slane %v711, 1
        %v809 = vrot.slane %v651, 1
        %vm810 = vcmp.lt.s32.totalorder %v735, 7
        %v811 = vsel %vm810, %v794, %v802
        %v812 = vsel %vm810, %v795, %v803
        %v813 = vsel %vm810, %v796, %v804
        %v814 = vsel %vm810, %v797, %v805
        %v815 = vsel %vm810, %v798, %v806
        %v816 = vsel %vm810, %v799, %v807
        %v817 = vsel %vm810, %v800, %v808
        %v818 = vsel %vm810, %v801, %v809
        %v819 = vsel %vm810, %v802, %v794
        %v820 = vsel %vm810, %v803, %v795
        %v821 = vsel %vm810, %v804, %v796
        %v822 = vsel %vm810, %v805, %v797
        %v823 = vsel %vm810, %v806, %v798
        %v824 = vsel %vm810, %v807, %v799
        %v825 = vsel %vm810, %v808, %v800
        %v826 = vsel %vm810, %v809, %v801
        %v827 = vsel %vm792, 1, 0
        %v828 = vsel %vm793, 1, 0
        %vm829 = vcmp.eq.s32.totalorder %v827, 1
        %vm830 = vcmp.eq.s32.totalorder %v828, 1
        %v831 = vsel %vm829, 0.0, %v811
        %v832 = vsel %vm830, 0.0, %v819
        %v833 = vsel %vm829, 0.0, %v812
        %v834 = vsel %vm830, 0.0, %v820
        %v835 = vsel %vm829, 0.0, %v813
        %v836 = vsel %vm830, 0.0, %v821
        %v837 = vsel %vm829, 0.0, %v814
        %v838 = vsel %vm830, 0.0, %v822
        %v839 = vsel %vm829, 0.0, %v815
        %v840 = vsel %vm830, 0.0, %v823
        %v841 = vsel %vm829, 0.0, %v816
        %v842 = vsel %vm830, 0.0, %v824
        %v843 = vsel %vm829, 0.0, %v817
        %v844 = vsel %vm830, 0.0, %v825
        %v845 = vsel %vm829, 0.0, %v818
        %v846 = vsel %vm830, 0.0, %v826
        %v847 = vadd.f32 %v718, %v776
        %v848 = vadd.f32 %v719, %v777
        %v849 = vadd.f32 %v720, %v778
        %v850 = vadd.f32 %v721, %v779
        %v851 = vadd.f32 %v722, %v780
        %v852 = vadd.f32 %v723, %v781
        %v853 = vadd.f32 %v724, %v782
        %v854 = vadd.f32 %v725, %v783
        %v855 = vadd.f32 %v726, %v784
        %v856 = vadd.f32 %v727, %v785
        %v857 = vadd.f32 %v728, %v786
        %v858 = vadd.f32 %v729, %v787
        %v859 = vadd.f32 %v730, %v788
        %v860 = vadd.f32 %v731, %v789
        %v861 = vadd.f32 %v732, %v790
        %v862 = vadd.f32 %v733, %v791
        %v863 = vadd.f32 %v847, %v831
        %v864 = vadd.f32 %v848, %v832
        %v865 = vadd.f32 %v849, %v833
        %v866 = vadd.f32 %v850, %v834
        %v867 = vadd.f32 %v851, %v835
        %v868 = vadd.f32 %v852, %v836
        %v869 = vadd.f32 %v853, %v837
        %v870 = vadd.f32 %v854, %v838
        %v871 = vadd.f32 %v855, %v839
        %v872 = vadd.f32 %v856, %v840
        %v873 = vadd.f32 %v857, %v841
        %v874 = vadd.f32 %v858, %v842
        %v875 = vadd.f32 %v859, %v843
        %v876 = vadd.f32 %v860, %v844
        %v877 = vadd.f32 %v861, %v845
        %v878 = vadd.f32 %v862, %v846
        %879 = vst [vmem:[%s370] sm:$0xff] %v863
        %880 = vst [vmem:[%s370 + $0x8] sm:$0xff] %v864
        %881 = vst [vmem:[%s370 + $0x10] sm:$0xff] %v865
        %882 = vst [vmem:[%s370 + $0x18] sm:$0xff] %v866
        %883 = vst [vmem:[%s370 + $0x20] sm:$0xff] %v867
        %884 = vst [vmem:[%s370 + $0x28] sm:$0xff] %v868
        %885 = vst [vmem:[%s370 + $0x30] sm:$0xff] %v869
        %886 = vst [vmem:[%s370 + $0x38] sm:$0xff] %v870
        %887 = vst [vmem:[%s370 + $0x40] sm:$0xff] %v871
        %888 = vst [vmem:[%s370 + $0x48] sm:$0xff] %v872
        %889 = vst [vmem:[%s370 + $0x50] sm:$0xff] %v873
        %890 = vst [vmem:[%s370 + $0x58] sm:$0xff] %v874
        %891 = vst [vmem:[%s370 + $0x60] sm:$0xff] %v875
        %892 = vst [vmem:[%s370 + $0x68] sm:$0xff] %v876
        %893 = vst [vmem:[%s370 + $0x70] sm:$0xff] %v877
        %894 = vst [vmem:[%s370 + $0x78] sm:$0xff] %v878
        %s895 = sand.u32 %s189, 1
        %s896 = scalar_lea.sflag [#allocation4], %s895
        %s897 = sand.u32 %s189, 1
        %s898 = smul.addr %s897, 128
        %s899 = scalar_lea.vmem [#allocation8], %s898
        // Predicated region
        $region53: #{tpu_custom_call.1} parent=39 // pred_check
          %p900 = pneg %p199
        $region54: #{tpu_custom_call.1} parent=39 // pred_check_branch
          %902 = sbr.rel (%p900) target = $region56
        $region55: #{tpu_custom_call.1} parent=39 // pred_region
          %s903 = smul.u32 8, %s30
          %s905 = ssub.s32 2048, 2048
          %906 = vsyncadd %s896, %s905
          %s907 = smul.addr %s903, 2
          %s908 = smul.addr %s29, 32
          %s909 = sadd.s32 %s907, %s908
          %s910 = smul.addr %s909, 128
          %s911 = scalar_lea.hbm %s5, %s910
          %s912 = sshll.u32 %s899, 4
          %s913 = int_to_ptr.vmem [resolvable:$true] %s912
          %918 = dma.vmem_to_hbm [thread:$0]  %s913, 2048, %s911, %s896, 128, 128, 8
        $region56: #{tpu_custom_call.1} parent=39 // pred_fallthru
          _
      $region40: #{tpu_custom_call.1} parent=5 // pred_fallthru
        _
      %p919 = scmp.le.s32.totalorder 2, %s20
      // Predicated region
      $region57: #{tpu_custom_call.1} parent=5 // pred_check
        %p920 = pneg %p919
      $region58: #{tpu_custom_call.1} parent=5 // pred_check_branch
        %922 = sbr.rel (%p920) target = $region60
      $region59: #{tpu_custom_call.1} parent=5 // pred_region
        %s923 = ssub.s32 %s20, 2
        // Predicated region
        $region61: #{tpu_custom_call.1} parent=59 // pred_check
          %p924 = pneg %p205
        $region62: #{tpu_custom_call.1} parent=59 // pred_check_branch
          %926 = sbr.rel (%p924) target = $region64
        $region63: #{tpu_custom_call.1} parent=59 // pred_region
          %s927 = sand.u32 %s190, 1
          %s928 = scalar_lea.sflag [#allocation4], %s927
          %s929 = sand.u32 %s190, 1
          %s930 = smul.addr %s929, 128
          %s931 = scalar_lea.vmem [#allocation8], %s930
          %932 = dma.done %s928, 2048
        $region64: #{tpu_custom_call.1} parent=59 // pred_fallthru
          _
      $region60: #{tpu_custom_call.1} parent=5 // pred_fallthru
        _
    $region6: #{tpu_custom_call.1} parent=1 // loop_footer
      %s24 = sadd.s32 1, %s20
    $region7: #{tpu_custom_call.1} parent=1 // loop_footer_branch
      %19 = sbr.rel target = $region3
    $region8: #{tpu_custom_call.1} parent=1 // loop_exit
      _
    %933 = vsyncpa [#allocation3], 1
    %s934 = scalar_lea.sflag [#allocation3], 1
    %935 = vsyncpa %s934, 1
    %936 = vsyncpa [#allocation6], 1
    %s937 = scalar_lea.sflag [#allocation6], 1
    %938 = vsyncpa %s937, 1
    %939 = vsyncpa [#allocation4], 1
    %s940 = scalar_lea.sflag [#allocation4], 1
    %941 = vsyncpa %s940, 1

</llo_original>
